<compile_context>
chip_gen: v7x
topology: tpu7x:2x2x1
jax: 0.10.0
libtpu: 0.0.40
codegen_flags: <defaults>
</compile_context>

<pallas_src>
import functools

import jax
import jax.numpy as jnp
from jax.experimental import pallas as pl
from jax.experimental.pallas import tpu as pltpu


# ----------------------------------------------------------------------------
# LearnFocal
# ----------------------------------------------------------------------------
def learn_focal_kernel(f_ref, hw_ref, out_ref):
    f = f_ref[...]
    out_ref[...] = f * f * hw_ref[...]


def learn_focal_forward(fx, fy, H, W):
    # LearnFocal.__init__ does `self.H = W; self.W = W` — preserve that quirk.
    self_H = float(W)
    self_W = float(W)
    f = jnp.asarray([[fx, fy]], jnp.float32)        # (1, 2)
    hw = jnp.asarray([[self_W, self_H]], jnp.float32)
    out = pl.pallas_call(
        learn_focal_kernel,
        out_shape=jax.ShapeDtypeStruct((1, 2), jnp.float32),
    )(f, hw)
    return out[0]                                    # (2,) = [fx^2*W, fy^2*H]


# ----------------------------------------------------------------------------
# NeRF MLP
# ----------------------------------------------------------------------------
def nerf_kernel(x_ref,
                w_emb, b_emb,
                w00, b00, w01, b01, w02, b02, w03, b03,
                w10, b10, w11, b11, w12, b12, w13, b13,
                w_df, b_df,
                w_r0f, w_r0d, b_r0,
                w_rgb, b_rgb,
                out_ref):
    f32 = jnp.float32
    bf16 = jnp.bfloat16
    D = w_r0f.shape[0]

    xb = x_ref[...]                                  # (tm, tpos_in+dir_in) bf16

    # embedding (no activation): zero-padded weight rows kill the dir part
    pt = jnp.dot(xb, w_emb[...], preferred_element_type=f32) + b_emb[...]

    # layers0: 4 x (Linear + ReLU)
    h = pt
    for w, b in ((w00, b00), (w01, b01), (w02, b02), (w03, b03)):
        h = jnp.maximum(
            jnp.dot(h.astype(bf16), w[...], preferred_element_type=f32) + b[...],
            0.0)

    # skip connection (f32)
    y = h + pt

    # layers1: 4 x (Linear + ReLU)
    for w, b in ((w10, b10), (w11, b11), (w12, b12), (w13, b13)):
        y = jnp.maximum(
            jnp.dot(y.astype(bf16), w[...], preferred_element_type=f32) + b[...],
            0.0)

    # fused feature + density heads: (tm, D+1) = [feat | density]
    z = jnp.dot(y.astype(bf16), w_df[...], preferred_element_type=f32) + b_df[...]
    feat = z[:, :D]
    density = z[:, D:]                               # (tm, 1)

    # rgb_layers: Linear(D + dir_in, D//2) + ReLU, dir part via zero-padded weight
    hr = (jnp.dot(feat.astype(bf16), w_r0f[...], preferred_element_type=f32)
          + jnp.dot(xb, w_r0d[...], preferred_element_type=f32)
          + b_r0[...])
    hr = jnp.maximum(hr, 0.0)

    # rgb head padded to 4 output columns; 4th column replaced by density.
    rgb4 = jnp.dot(hr.astype(bf16), w_rgb[...], preferred_element_type=f32) + b_rgb[...]
    col = jax.lax.broadcasted_iota(jnp.int32, rgb4.shape, 1)
    out_ref[...] = jnp.where(col < 3, rgb4, density)


def make_nerf_params(key, tpos_in_dims, dir_in_dims, D):
    """Deterministic synthetic parameters (weights stored as (in, out), f32)."""
    def lin(k, fan_in, fan_out):
        kw, kb = jax.random.split(k)
        bound = 1.0 / jnp.sqrt(fan_in)
        w = jax.random.uniform(kw, (fan_in, fan_out), jnp.float32, -bound, bound)
        b = jax.random.uniform(kb, (1, fan_out), jnp.float32, -bound, bound)
        return w, b

    keys = jax.random.split(key, 16)
    p = {}
    p["w_emb"], p["b_emb"] = lin(keys[0], tpos_in_dims, D)
    for i in range(4):
        p[f"w0{i}"], p[f"b0{i}"] = lin(keys[1 + i], D, D)
    for i in range(4):
        p[f"w1{i}"], p[f"b1{i}"] = lin(keys[5 + i], D, D)
    p["w_den"], p["b_den"] = lin(keys[9], D, 1)
    p["b_den"] = jnp.full((1, 1), 0.1, jnp.float32)            # fc_density.bias = 0.1
    p["w_feat"], p["b_feat"] = lin(keys[10], D, D)
    w_r0, p["b_r0"] = lin(keys[11], D + dir_in_dims, D // 2)
    p["w_r0f"] = w_r0[:D]                                      # feat part
    p["w_r0d"] = w_r0[D:]                                      # dir part
    p["w_rgb"], p["b_rgb"] = lin(keys[12], D // 2, 3)
    p["b_rgb"] = jnp.full((1, 3), 0.02, jnp.float32)           # fc_rgb.bias = 0.02
    return p


KERNEL_PARAM_ORDER = (
    "w_emb", "b_emb",
    "w00", "b00", "w01", "b01", "w02", "b02", "w03", "b03",
    "w10", "b10", "w11", "b11", "w12", "b12", "w13", "b13",
    "w_df", "b_df",
    "w_r0f", "w_r0d", "b_r0",
    "w_rgb", "b_rgb",
)


def prepare_kernel_params(params, tpos_in, dir_in):
    """Repack the f32 reference params into the kernel layout (bf16 weights)."""
    D = params["w_feat"].shape[0]
    bf16 = jnp.bfloat16
    kp = {}
    # embedding weight zero-padded so the fused [tpos|dir] input can be used.
    kp["w_emb"] = jnp.concatenate(
        [params["w_emb"], jnp.zeros((dir_in, D), jnp.float32)], axis=0).astype(bf16)
    kp["b_emb"] = params["b_emb"]
    for i in range(4):
        kp[f"w0{i}"] = params[f"w0{i}"].astype(bf16)
        kp[f"b0{i}"] = params[f"b0{i}"]
        kp[f"w1{i}"] = params[f"w1{i}"].astype(bf16)
        kp[f"b1{i}"] = params[f"b1{i}"]
    # fused feature+density head
    kp["w_df"] = jnp.concatenate([params["w_feat"], params["w_den"]], axis=1).astype(bf16)
    kp["b_df"] = jnp.concatenate([params["b_feat"], params["b_den"]], axis=1)
    kp["w_r0f"] = params["w_r0f"].astype(bf16)
    # dir weight zero-padded over the tpos rows (same fused input as embedding)
    kp["w_r0d"] = jnp.concatenate(
        [jnp.zeros((tpos_in, D // 2), jnp.float32), params["w_r0d"]], axis=0).astype(bf16)
    kp["b_r0"] = params["b_r0"]
    # rgb head padded to 4 columns (4th column is overwritten by density)
    kp["w_rgb"] = jnp.concatenate(
        [params["w_rgb"], jnp.zeros((D // 2, 1), jnp.float32)], axis=1).astype(bf16)
    kp["b_rgb"] = jnp.concatenate(
        [params["b_rgb"], jnp.zeros((1, 1), jnp.float32)], axis=1)
    return kp


@functools.partial(jax.jit, static_argnames=("tile_m",))
def _nerf_forward_flat(x_in, kp, *, tile_m):
    M, C = x_in.shape
    grid_m = pl.cdiv(M, tile_m)
    M_pad = grid_m * tile_m
    if M_pad != M:
        x_in = jnp.pad(x_in, ((0, M_pad - M), (0, 0)))

    param_list = [kp[name] for name in KERNEL_PARAM_ORDER]

    def full_spec(a):
        return pl.BlockSpec(a.shape, lambda i: (0, 0))

    in_specs = ([pl.BlockSpec((tile_m, C), lambda i: (i, 0))]
                + [full_spec(a) for a in param_list])

    D = kp["w_r0f"].shape[0]
    Dh = D // 2
    flops_per_row = 2 * (C * D + 8 * D * D + D * (D + 1) + D * Dh + C * Dh + Dh * 4)
    param_bytes = sum(int(a.size) * a.dtype.itemsize for a in param_list)
    cost = pl.CostEstimate(
        flops=int(flops_per_row) * int(M_pad),
        transcendentals=0,
        bytes_accessed=int(M_pad) * (C * 2 + 4 * 4) + param_bytes)

    compiler_kwargs = dict(dimension_semantics=("parallel",))
    if tile_m > 2048:
        compiler_kwargs["vmem_limit_bytes"] = 48 * 1024 * 1024

    out = pl.pallas_call(
        nerf_kernel,
        out_shape=jax.ShapeDtypeStruct((M_pad, 4), jnp.float32),
        grid_spec=pltpu.PrefetchScalarGridSpec(
            num_scalar_prefetch=0,
            grid=(grid_m,),
            in_specs=in_specs,
            out_specs=pl.BlockSpec((tile_m, 4), lambda i: (i, 0)),
        ),
        compiler_params=pltpu.CompilerParams(**compiler_kwargs),
        cost_estimate=cost,
    )(x_in, *param_list)

    return out[:M]


def nerf_forward(tpos_enc, dir_enc, params, tile_m=512):
    H_, W_, N_, tpos_in = tpos_enc.shape
    dir_in = dir_enc.shape[-1]
    M = H_ * W_ * N_
    # Single fused (M, tpos_in + dir_in) input, cast to bf16 (only ever used as
    # an MXU operand, so this is identical to casting inside the kernel).
    x_in = jnp.concatenate(
        [tpos_enc.reshape(M, tpos_in), dir_enc.reshape(M, dir_in)],
        axis=-1).astype(jnp.bfloat16)
    kp = prepare_kernel_params(params, tpos_in, dir_in)
    out = _nerf_forward_flat(x_in, kp, tile_m=tile_m)
    return out.reshape(H_, W_, N_, 4)


def nerf_reference(tpos_enc, dir_enc, params, matmul_dtype=jnp.float32):
    """Pure-JAX reference mirroring the PyTorch forward.

    matmul_dtype=jnp.bfloat16 emulates the kernel's bf16-MXU / f32-accumulate
    numerics; jnp.float32 gives the exact original-module math.
    """
    def mm(a, w):
        return jnp.dot(a.astype(matmul_dtype), w.astype(matmul_dtype),
                       preferred_element_type=jnp.float32)

    pt = mm(tpos_enc, params["w_emb"]) + params["b_emb"]
    x = pt
    for i in range(4):
        x = jax.nn.relu(mm(x, params[f"w0{i}"]) + params[f"b0{i}"])
    y = x + pt
    for i in range(4):
        y = jax.nn.relu(mm(y, params[f"w1{i}"]) + params[f"b1{i}"])
    density = mm(y, params["w_den"]) + params["b_den"]
    feat = mm(y, params["w_feat"]) + params["b_feat"]
    h = jax.nn.relu(mm(feat, params["w_r0f"]) + mm(dir_enc, params["w_r0d"])
                    + params["b_r0"])
    rgb = mm(h, params["w_rgb"]) + params["b_rgb"]
    return jnp.concatenate([rgb, density], axis=-1)


if __name__ == "__main__":
    key = jax.random.PRNGKey(0)
    k_params, k_tpos, k_dir = jax.random.split(key, 3)

    # ---- LearnFocal ----
    H_IMG, W_IMG = 384, 512               # loader resizes images to 512 x 384
    fx, fy = 1.2, 0.9
    fxfy = jax.block_until_ready(learn_focal_forward(fx, fy, H_IMG, W_IMG))
    # module quirk: self.H = W, so both entries use W
    expected = jnp.asarray([fx * fx * W_IMG, fy * fy * W_IMG], jnp.float32)
    assert fxfy.shape == (2,)
    assert jnp.allclose(fxfy, expected, atol=1e-3, rtol=1e-5), "LearnFocal mismatch"

    # ---- NeRF MLP ----
    # (H, W, N_sample, C): M = 2048 rows -> grid of 4 parallel tiles of 512
    H, W, N_SAMPLE = 8, 16, 16
    TPOS_IN, DIR_IN, D = 32, 24, 64

    params = make_nerf_params(k_params, TPOS_IN, DIR_IN, D)
    tpos_enc = jax.random.normal(k_tpos, (H, W, N_SAMPLE, TPOS_IN), jnp.float32)
    dir_enc = jax.random.normal(k_dir, (H, W, N_SAMPLE, DIR_IN), jnp.float32)

    out = nerf_forward(tpos_enc, dir_enc, params, tile_m=512)
    out = jax.block_until_ready(out)
    assert out.shape == (H, W, N_SAMPLE, 4)

    ref_bf16 = nerf_reference(tpos_enc, dir_enc, params, jnp.bfloat16)
    ref_f32 = nerf_reference(tpos_enc, dir_enc, params, jnp.float32)
    assert jnp.allclose(out, ref_bf16, atol=1e-2, rtol=1e-2), \
        "mismatch vs bf16-emulating reference"
    assert jnp.allclose(out, ref_f32, atol=1.5e-1, rtol=1.5e-1), \
        "mismatch vs f32 reference"

    print("KERNEL_OK")
</pallas_src>

<mosaic_0001>
module attributes {stable_mosaic.version = 11 : i64} {
  func.func @learn_focal_kernel(%arg0: memref<1x2xf32, #tpu.memory_space<vmem>>, %arg1: memref<1x2xf32, #tpu.memory_space<vmem>>, %arg2: memref<1x2xf32, #tpu.memory_space<vmem>>) attributes {dimension_semantics = [], scalar_prefetch = 0 : i64, scratch_operands = 0 : i64, tpu.core_type = #tpu.core_type<tc>} {
    %c0 = arith.constant 0 : index
    %c0_0 = arith.constant 0 : index
    %0 = vector.load %arg0[%c0, %c0_0] : memref<1x2xf32, #tpu.memory_space<vmem>>, vector<1x2xf32>
    %1 = arith.mulf %0, %0 : vector<1x2xf32>
    %c0_1 = arith.constant 0 : index
    %c0_2 = arith.constant 0 : index
    %2 = vector.load %arg1[%c0_1, %c0_2] : memref<1x2xf32, #tpu.memory_space<vmem>>, vector<1x2xf32>
    %3 = arith.mulf %1, %2 : vector<1x2xf32>
    %c0_3 = arith.constant 0 : index
    %c0_4 = arith.constant 0 : index
    %4 = vector.load %arg2[%c0_3, %c0_4] : memref<1x2xf32, #tpu.memory_space<vmem>>, vector<1x2xf32>
    tpu.vector_store %arg2[%c0_3, %c0_4], %3 {strides = array<i32>} : memref<1x2xf32, #tpu.memory_space<vmem>>, vector<1x2xf32>,
    return
  }
}

</mosaic_0001>

<llo_original>
// kernel: tpu_custom_call.1
$region0: #{tpu_custom_call.1}
  #allocation0 [shape = 'u32[]', space=smem, size = 0x4, offset = 0x4, fixed_abs, tag = 'smem constant byte address 0x4 - core index']
  #allocation1 [shape = 'u32[144,128]{1,0:T(1,128)}', space=vmem, size = 0x12000, scoped, tag = 'internal scratch']
  %s0 = inlined_call_operand.hbm [shape: f32[1,2], index: 0, kind: input, shape index: {}]
  %s1 = inlined_call_operand.vmem [shape: f32[1,2], index: 1, kind: input, shape index: {}]
  %s2 = inlined_call_operand.hbm [shape: f32[1,2], index: 2, kind: output, shape index: {}]
  %s3 = sld [smem:[#allocation0]]
  $region22: #{tpu_custom_call.1} parent=0
    _
  %s5 = ssub.s32 1, %s3
  %s6 = scalar_select 0, %s5, %s3
  $region1: #{tpu_custom_call.1} parent=0
    #allocation2 [shape = 'u8[512]{0}', space=vmem, size = 0x400, scoped, tag = 'input window, operand 0, single buffered']
    #allocation3 [shape = 's32[1]{0}', space=sflag, size = 0x4, scoped, tag = 'scoped memory for tpu_custom_call.1']
    #allocation4 [shape = 's32[1]{0}', space=sflag, size = 0x4, scoped, tag = 'scoped memory for tpu_custom_call.1']
    #allocation5 [shape = 'u8[512]{0}', space=vmem, size = 0x400, scoped, tag = 'output window, operand 0, single buffered']
    %7 = vsyncpa [#allocation3], 0
    %8 = vsyncpa [#allocation4], 0
    // Predicated region
    $region2: #{tpu_custom_call.1} parent=1 // pred_check
      _
    $region3: #{tpu_custom_call.1} parent=1 // pred_check_branch
      %10 = sbr.rel (0) target = $region5
    $region4: #{tpu_custom_call.1} parent=1 // pred_region
      %s12 = ssub.s32 16, 16
      %13 = vsyncadd [#allocation3], %s12
      %s15 = sshll.u32 [#allocation2], 4
      %s16 = int_to_ptr.vmem [resolvable:$true] %s15
      %18 = dma.hbm_to_vmem [thread:$0]  %s0, 16, %s16, [#allocation3]
    $region5: #{tpu_custom_call.1} parent=1 // pred_fallthru
      _
    // Predicated region
    $region6: #{tpu_custom_call.1} parent=1 // pred_check
      _
    $region7: #{tpu_custom_call.1} parent=1 // pred_check_branch
      %20 = sbr.rel (0) target = $region9
    $region8: #{tpu_custom_call.1} parent=1 // pred_region
      _
    $region9: #{tpu_custom_call.1} parent=1 // pred_fallthru
      _
    // Predicated region
    $region10: #{tpu_custom_call.1} parent=1 // pred_check
      _
    $region11: #{tpu_custom_call.1} parent=1 // pred_check_branch
      %22 = sbr.rel (0) target = $region13
    $region12: #{tpu_custom_call.1} parent=1 // pred_region
      %23 = dma.done [#allocation3], 16
    $region13: #{tpu_custom_call.1} parent=1 // pred_fallthru
      _
    %v24 = vld [vmem:[#allocation2] sm:$0x1]
    %v25 = vmul.f32 %v24, %v24
    %v26 = vld [vmem:[%s1] sm:$0x1]
    %v27 = vmul.f32 %v25, %v26
    %vm28 = vcmask 8192
    %29 = vst.msk [vmem:[#allocation5] sm:$0x1] %vm28, %v27
    // Predicated region
    $region14: #{tpu_custom_call.1} parent=1 // pred_check
      _
    $region15: #{tpu_custom_call.1} parent=1 // pred_check_branch
      %31 = sbr.rel (0) target = $region17
    $region16: #{tpu_custom_call.1} parent=1 // pred_region
      %s33 = ssub.s32 16, 16
      %34 = vsyncadd [#allocation4], %s33
      %s36 = sshll.u32 [#allocation5], 4
      %s37 = int_to_ptr.vmem [resolvable:$true] %s36
      %39 = dma.vmem_to_hbm [thread:$0]  %s37, 16, %s2, [#allocation4]
    $region17: #{tpu_custom_call.1} parent=1 // pred_fallthru
      _
    // Predicated region
    $region18: #{tpu_custom_call.1} parent=1 // pred_check
      _
    $region19: #{tpu_custom_call.1} parent=1 // pred_check_branch
      %41 = sbr.rel (0) target = $region21
    $region20: #{tpu_custom_call.1} parent=1 // pred_region
      %42 = dma.done [#allocation4], 16
    $region21: #{tpu_custom_call.1} parent=1 // pred_fallthru
      _
    %43 = vsyncpa [#allocation3], 1
    %44 = vsyncpa [#allocation4], 1

</llo_original>
